<compile_context>
chip_gen: v7x
topology: tpu7x:2x2x1
jax: 0.10.0
libtpu: 0.0.40
codegen_flags: <defaults>
</compile_context>

<pallas_src>
import jax
import jax.numpy as jnp
from jax.experimental import pallas as pl
from jax.experimental.pallas import tpu as pltpu

_SQRT_2_OVER_PI = 0.7978845608028654
_BN_EPS = 1e-5


# ------------------------------ in-kernel math ------------------------------ #
def _gelu(x):
    # tanh-approximation GELU (tanh runs on the EUP slot).
    # TODO(synk): PyTorch nn.GELU defaults to exact erf; tanh approx deviates ~1e-3.
    return 0.5 * x * (1.0 + jnp.tanh(_SQRT_2_OVER_PI * (x + 0.044715 * x * x * x)))


# --------------------------------- kernels ---------------------------------- #
def _conv1_kernel(x_ref, sb_ref, w_ref, c_ref, stats_ref):
    # x_ref: (1, Cin, th) f32   sb: (Cin, 2)   w: (Cexp, Cin) bf16
    # c_ref: (1, Cexp, th) bf16   stats_ref: (1, 1, Cexp, 2) f32
    xb = x_ref[0]                                       # (Cin, th)
    s = sb_ref[:, 0:1]
    b = sb_ref[:, 1:2]
    u = _gelu(s * xb + b).astype(jnp.bfloat16)          # folded BN1 + GELU, bf16 MXU operand
    c = jnp.dot(w_ref[...], u,                          # 1x1 conv == matmul, f32 accumulate
                preferred_element_type=jnp.float32)     # (Cexp, th)
    c_ref[0] = c.astype(jnp.bfloat16)                   # bf16 HBM intermediate
    # Fused partial BN2 statistics for this tile (finished in the wrapper).
    # TODO(synk): E[x^2]-m^2 can cancel for large-mean activations; switch to a
    #             compensated accumulation if that ever becomes a concern.
    stats_ref[0, 0, :, 0:1] = jnp.sum(c, axis=1, keepdims=True)
    stats_ref[0, 0, :, 1:2] = jnp.sum(c * c, axis=1, keepdims=True)


def _proj_kernel(c_ref, p_ref, mask_ref, o_ref):
    # c_ref: (1, tc, H) bf16   p: (tc, 8) [s2,b2,w0,w1,w2,pad]   mask: (2, H)
    # o_ref: (1, tc, H) f32
    cb = c_ref[0].astype(jnp.float32)                   # (tc, H) bf16 -> f32 (v5e-safe)
    H = cb.shape[1]
    s, b = p_ref[:, 0:1], p_ref[:, 1:2]
    w0, w1, w2 = p_ref[:, 2:3], p_ref[:, 3:4], p_ref[:, 4:5]
    v = _gelu(s * cb + b)                               # folded BN2 + GELU
    # depthwise k=3, pad=1 (cross-correlation):
    #   out[c,h] = w0[c]*v[c,h-1] + w1[c]*v[c,h] + w2[c]*v[c,h+1]
    # Rolls use non-negative shifts (XLU slot); boundary columns zeroed by the
    # precomputed mask (row 0 kills column 0, row 1 kills column H-1).
    left = pltpu.roll(v, 1, axis=1) * mask_ref[0:1, :]          # v[:, h-1]
    right = pltpu.roll(v, H - 1, axis=1) * mask_ref[1:2, :]     # v[:, h+1]
    o_ref[0] = w0 * left + w1 * v + w2 * right + cb             # + residual


# ------------------------------ tile selection ------------------------------ #
def _pick_tile_h(H, c_in, c_exp, budget_bytes=24 << 20):
    # Largest lane tile (multiple of 128) dividing H that fits a double-buffered
    # f32-in / bf16-out block under the VMEM budget (safe for v7x's 64 MiB too).
    for th in (2048, 1024, 512, 256, 128):
        if H % th == 0 and 2 * th * (c_in * 4 + c_exp * 2) <= budget_bytes:
            return th
    # TODO(synk): pad ragged H up to a multiple of 128 (needs stats masking).
    return H  # full-dim block: always legal


def _pick_tile_c(c_exp, H, budget_bytes=24 << 20):
    # Channel tile for the proj kernel (depthwise conv -> no halos needed).
    per_row = 2 * H * (2 + 4)              # double-buffered bf16 in + f32 out
    cap = max(8, (budget_bytes // per_row) // 8 * 8)
    if c_exp <= cap:
        return c_exp
    for tc in range(cap, 7, -8):
        if c_exp % tc == 0:
            return tc
    return c_exp


# ------------------------------ pallas_call wrappers ------------------------ #
def _conv1_call(x, sb1, w1_bf16):
    B, C, H = x.shape
    Cexp = w1_bf16.shape[0]
    th = _pick_tile_h(H, C, Cexp)
    nh = H // th
    return pl.pallas_call(
        _conv1_kernel,
        grid=(B, nh),
        in_specs=[
            pl.BlockSpec((1, C, th), lambda b, j: (b, 0, j)),
            pl.BlockSpec((C, 2), lambda b, j: (0, 0)),
            pl.BlockSpec((Cexp, C), lambda b, j: (0, 0)),
        ],
        out_specs=[
            pl.BlockSpec((1, Cexp, th), lambda b, j: (b, 0, j)),
            pl.BlockSpec((1, 1, Cexp, 2), lambda b, j: (b, j, 0, 0)),
        ],
        out_shape=(
            jax.ShapeDtypeStruct((B, Cexp, H), jnp.bfloat16),       # c1 in bf16
            jax.ShapeDtypeStruct((B, nh, Cexp, 2), jnp.float32),    # partial BN2 stats
        ),
        compiler_params=pltpu.CompilerParams(
            dimension_semantics=("parallel", "parallel")),
    )(x, sb1, w1_bf16)


def _proj_call(c1, p2, mask):
    B, Cexp, H = c1.shape
    tc = _pick_tile_c(Cexp, H)
    return pl.pallas_call(
        _proj_kernel,
        grid=(B, Cexp // tc),
        in_specs=[
            pl.BlockSpec((1, tc, H), lambda b, c: (b, c, 0)),
            pl.BlockSpec((tc, 8), lambda b, c: (c, 0)),
            pl.BlockSpec((2, H), lambda b, c: (0, 0)),
        ],
        out_specs=pl.BlockSpec((1, tc, H), lambda b, c: (b, c, 0)),
        out_shape=jax.ShapeDtypeStruct((B, Cexp, H), jnp.float32),
        compiler_params=pltpu.CompilerParams(
            dimension_semantics=("parallel", "parallel")),
    )(c1, p2, mask)


# ----------------------------------- forward -------------------------------- #
def _folded_bn1(x, gamma, beta, eps=_BN_EPS):
    # Train-mode BatchNorm1d over (B, H); two-pass variance (cancellation-safe).
    m = jnp.mean(x, axis=(0, 2))
    var = jnp.mean((x - m[None, :, None]) ** 2, axis=(0, 2))
    scale = gamma / jnp.sqrt(var + eps)
    shift = beta - scale * m
    return jnp.stack([scale, shift], axis=1)            # (C, 2)


@jax.jit
def mlp_forward(x, params):
    B, C, H = x.shape
    # stage 1: fold BN1 in the wrapper, run conv1 kernel (emits c1 + BN2 stats)
    sb1 = _folded_bn1(x, params["bn1_g"], params["bn1_b"])
    c1, stats = _conv1_call(x, sb1, params["w1"].astype(jnp.bfloat16))

    # finish BN2 statistics (tiny reduction; no HBM re-read of c1)
    tot = jnp.sum(stats, axis=(0, 1))                   # (Cexp, 2)
    n = B * H
    m2 = tot[:, 0] / n
    var2 = jnp.maximum(tot[:, 1] / n - m2 * m2, 0.0)
    s2 = params["bn2_g"] / jnp.sqrt(var2 + _BN_EPS)
    b2 = params["bn2_b"] - s2 * m2

    # pack per-channel proj params into a single lane-padded (Cexp, 8) array
    w = params["w_dw"]                                  # (Cexp, 3)
    zeros = jnp.zeros_like(s2)
    p2 = jnp.stack([s2, b2, w[:, 0], w[:, 1], w[:, 2], zeros, zeros, zeros], axis=1)

    # boundary mask for the k=3 / pad=1 depthwise conv
    idx = jnp.arange(H)
    mask = jnp.stack([(idx > 0).astype(jnp.float32),
                      (idx < H - 1).astype(jnp.float32)], axis=0)   # (2, H)

    return _proj_call(c1, p2, mask)


# ------------------------------ params & reference --------------------------- #
def init_mlp_params(key, in_features, expand_ratio=1):
    ef = in_features * expand_ratio
    ks = jax.random.split(key, 6)
    rnd = lambda k, shape, s=0.2: s * jax.random.normal(k, shape, jnp.float32)
    return {
        "bn1_g": 1.0 + rnd(ks[0], (in_features,), 0.1),
        "bn1_b": rnd(ks[1], (in_features,), 0.1),
        "w1": rnd(ks[2], (ef, in_features)),     # Conv1d(C, ef, 1, bias=False) weight [ef, C, 1]
        "bn2_g": 1.0 + rnd(ks[3], (ef,), 0.1),
        "bn2_b": rnd(ks[4], (ef,), 0.1),
        "w_dw": rnd(ks[5], (ef, 3)),             # depthwise Conv1d(ef, ef, 3, groups=ef) weight [ef, 1, 3]
    }


def mlp_reference(x, params, eps=_BN_EPS):
    # Pure-jnp reference.  Mirrors the kernel's deliberate precision choices
    # (tanh-GELU, bf16 MXU operands, bf16 c1 storage) so the check stays tight
    # on structure (BN folding, 1x1 conv, depthwise conv, boundary masks, residual).
    def bn(y, g, b):
        m = jnp.mean(y, axis=(0, 2), keepdims=True)
        v = jnp.mean((y - m) ** 2, axis=(0, 2), keepdims=True)
        return g[None, :, None] * (y - m) / jnp.sqrt(v + eps) + b[None, :, None]

    bf = lambda a: a.astype(jnp.bfloat16).astype(jnp.float32)
    u = _gelu(bn(x, params["bn1_g"], params["bn1_b"]))
    c1 = jnp.einsum("oc,bch->boh", bf(params["w1"]), bf(u))   # bf16 operands, f32 accum
    c1 = bf(c1)                                               # bf16 storage of c1
    v = _gelu(bn(c1, params["bn2_g"], params["bn2_b"]))
    vp = jnp.pad(v, ((0, 0), (0, 0), (1, 1)))
    w = params["w_dw"]
    dw = (w[None, :, 0:1] * vp[:, :, 0:-2]
          + w[None, :, 1:2] * vp[:, :, 1:-1]
          + w[None, :, 2:3] * vp[:, :, 2:])
    return dw + c1


# ----------------------------------- main ------------------------------------ #
if __name__ == "__main__":
    key = jax.random.PRNGKey(0)
    kx, kp = jax.random.split(key)

    B, C, H = 2, 16, 128                      # small NCL shapes for Conv1d-style input
    x = jax.random.normal(kx, (B, C, H), jnp.float32)
    params = init_mlp_params(kp, C, expand_ratio=1)

    y = mlp_forward(x, params)
    jax.block_until_ready(y)

    y_ref = mlp_reference(x, params)
    assert y.shape == (B, C, H)
    assert bool(jnp.all(jnp.isfinite(y)))
    max_err = float(jnp.max(jnp.abs(y - y_ref)))
    assert max_err < 2e-2, f"mismatch vs reference: max abs err {max_err}"
    print("KERNEL_OK")
</pallas_src>

<mosaic_0001>
module attributes {stable_mosaic.version = 11 : i64} {
  func.func @_conv1_kernel(%arg0: i32, %arg1: i32, %arg2: memref<1x16x128xf32, #tpu.memory_space<vmem>>, %arg3: memref<16x2xf32, #tpu.memory_space<vmem>>, %arg4: memref<16x16xbf16, #tpu.memory_space<vmem>>, %arg5: memref<1x16x128xbf16, #tpu.memory_space<vmem>>, %arg6: memref<1x1x16x2xf32, #tpu.memory_space<vmem>>) attributes {dimension_semantics = [#tpu.dimension_semantics<parallel>, #tpu.dimension_semantics<parallel>], iteration_bounds = array<i64: 2, 1>, scalar_prefetch = 0 : i64, scratch_operands = 0 : i64, tpu.core_type = #tpu.core_type<tc>, window_params = [{transform_indices = @transform_0, window_bounds = array<i64: 1, 16, 128>}, {pipeline_mode = #tpu.pipeline_mode<synchronous>, transform_indices = @transform_1, window_bounds = array<i64: 16, 2>}, {pipeline_mode = #tpu.pipeline_mode<synchronous>, transform_indices = @transform_2, window_bounds = array<i64: 16, 16>}, {transform_indices = @transform_3, window_bounds = array<i64: 1, 16, 128>}, {transform_indices = @transform_4, window_bounds = array<i64: 1, 1, 16, 2>}]} {
    %c0 = arith.constant 0 : index
    %c0_0 = arith.constant 0 : index
    %c0_1 = arith.constant 0 : index
    %0 = vector.load %arg2[%c0, %c0_0, %c0_1] : memref<1x16x128xf32, #tpu.memory_space<vmem>>, vector<1x16x128xf32>
    %1 = vector.shape_cast %0 : vector<1x16x128xf32> to vector<16x128xf32>
    %c0_2 = arith.constant 0 : index
    %c0_3 = arith.constant 0 : index
    %2 = vector.load %arg3[%c0_2, %c0_3] : memref<16x2xf32, #tpu.memory_space<vmem>>, vector<16x1xf32>
    %c0_4 = arith.constant 0 : index
    %c1 = arith.constant 1 : index
    %3 = vector.load %arg3[%c0_4, %c1] : memref<16x2xf32, #tpu.memory_space<vmem>>, vector<16x1xf32>
    %4 = vector.broadcast %2 : vector<16x1xf32> to vector<16x128xf32>
    %5 = arith.mulf %4, %1 : vector<16x128xf32>
    %6 = vector.broadcast %3 : vector<16x1xf32> to vector<16x128xf32>
    %7 = arith.addf %5, %6 : vector<16x128xf32>
    %cst = arith.constant 5.000000e-01 : f32
    %8 = vector.broadcast %cst : f32 to vector<16x128xf32>
    %9 = arith.mulf %8, %7 : vector<16x128xf32>
    %cst_5 = arith.constant 4.471500e-02 : f32
    %10 = vector.broadcast %cst_5 : f32 to vector<16x128xf32>
    %11 = arith.mulf %10, %7 : vector<16x128xf32>
    %12 = arith.mulf %11, %7 : vector<16x128xf32>
    %13 = arith.mulf %12, %7 : vector<16x128xf32>
    %14 = arith.addf %7, %13 : vector<16x128xf32>
    %cst_6 = arith.constant 0.797884583 : f32
    %15 = vector.broadcast %cst_6 : f32 to vector<16x128xf32>
    %16 = arith.mulf %15, %14 : vector<16x128xf32>
    %17 = math.tanh %16 : vector<16x128xf32>
    %cst_7 = arith.constant 1.000000e+00 : f32
    %18 = vector.broadcast %cst_7 : f32 to vector<16x128xf32>
    %19 = arith.addf %18, %17 : vector<16x128xf32>
    %20 = arith.mulf %9, %19 : vector<16x128xf32>
    %21 = arith.truncf %20 : vector<16x128xf32> to vector<16x128xbf16>
    %c0_8 = arith.constant 0 : index
    %c0_9 = arith.constant 0 : index
    %22 = vector.load %arg4[%c0_8, %c0_9] : memref<16x16xbf16, #tpu.memory_space<vmem>>, vector<16x16xbf16>
    %cst_10 = arith.constant dense<0.000000e+00> : vector<16x128xf32>
    %23 = tpu.matmul %22, %21, %cst_10 {dimension_numbers = #tpu.dot_dimension_numbers<[1], [0], [0], [1], [0, 0, 1, 1], [], []>} : vector<16x16xbf16>, vector<16x128xbf16>, vector<16x128xf32> -> vector<16x128xf32>
    %24 = arith.truncf %23 : vector<16x128xf32> to vector<16x128xbf16>
    %c0_11 = arith.constant 0 : index
    %c0_12 = arith.constant 0 : index
    %c0_13 = arith.constant 0 : index
    %25 = vector.load %arg5[%c0_11, %c0_12, %c0_13] : memref<1x16x128xbf16, #tpu.memory_space<vmem>>, vector<1x16x128xbf16>
    %26 = vector.shape_cast %25 : vector<1x16x128xbf16> to vector<16x128xbf16>
    %27 = vector.shape_cast %24 : vector<16x128xbf16> to vector<1x16x128xbf16>
    tpu.vector_store %arg5[%c0_11, %c0_12, %c0_13], %27 {strides = array<i32>} : memref<1x16x128xbf16, #tpu.memory_space<vmem>>, vector<1x16x128xbf16>,
    %cst_14 = arith.constant dense<0.000000e+00> : vector<16xf32>
    %28 = vector.multi_reduction <add>, %23, %cst_14 [1] : vector<16x128xf32> to vector<16xf32>
    %29 = vector.shape_cast %28 : vector<16xf32> to vector<16x1xf32>
    %c0_15 = arith.constant 0 : index
    %c0_16 = arith.constant 0 : index
    %c0_17 = arith.constant 0 : index
    %c0_18 = arith.constant 0 : index
    %30 = vector.load %arg6[%c0_15, %c0_16, %c0_17, %c0_18] : memref<1x1x16x2xf32, #tpu.memory_space<vmem>>, vector<1x1x16x1xf32>
    %31 = vector.shape_cast %30 : vector<1x1x16x1xf32> to vector<16x1xf32>
    %32 = vector.shape_cast %29 : vector<16x1xf32> to vector<1x1x16x1xf32>
    tpu.vector_store %arg6[%c0_15, %c0_16, %c0_17, %c0_18], %32 {strides = array<i32>} : memref<1x1x16x2xf32, #tpu.memory_space<vmem>>, vector<1x1x16x1xf32>,
    %33 = arith.mulf %23, %23 : vector<16x128xf32>
    %cst_19 = arith.constant dense<0.000000e+00> : vector<16xf32>
    %34 = vector.multi_reduction <add>, %33, %cst_19 [1] : vector<16x128xf32> to vector<16xf32>
    %35 = vector.shape_cast %34 : vector<16xf32> to vector<16x1xf32>
    %c0_20 = arith.constant 0 : index
    %c0_21 = arith.constant 0 : index
    %c0_22 = arith.constant 0 : index
    %c1_23 = arith.constant 1 : index
    %36 = vector.load %arg6[%c0_20, %c0_21, %c0_22, %c1_23] : memref<1x1x16x2xf32, #tpu.memory_space<vmem>>, vector<1x1x16x1xf32>
    %37 = vector.shape_cast %36 : vector<1x1x16x1xf32> to vector<16x1xf32>
    %38 = vector.shape_cast %35 : vector<16x1xf32> to vector<1x1x16x1xf32>
    tpu.vector_store %arg6[%c0_20, %c0_21, %c0_22, %c1_23], %38 {strides = array<i32>} : memref<1x1x16x2xf32, #tpu.memory_space<vmem>>, vector<1x1x16x1xf32>,
    return
  }
  func.func @transform_0(%arg0: i32, %arg1: i32) -> (i32, i32, i32) {
    %c0_i32 = arith.constant 0 : i32
    %c0_i32_0 = arith.constant 0 : i32
    return %arg0, %c0_i32, %arg1 : i32, i32, i32
  }
  func.func @transform_1(%arg0: i32, %arg1: i32) -> (i32, i32) {
    %c0_i32 = arith.constant 0 : i32
    %c0_i32_0 = arith.constant 0 : i32
    %c0_i32_1 = arith.constant 0 : i32
    return %c0_i32, %c0_i32_0 : i32, i32
  }
  func.func @transform_2(%arg0: i32, %arg1: i32) -> (i32, i32) {
    %c0_i32 = arith.constant 0 : i32
    %c0_i32_0 = arith.constant 0 : i32
    %c0_i32_1 = arith.constant 0 : i32
    return %c0_i32, %c0_i32_0 : i32, i32
  }
  func.func @transform_3(%arg0: i32, %arg1: i32) -> (i32, i32, i32) {
    %c0_i32 = arith.constant 0 : i32
    %c0_i32_0 = arith.constant 0 : i32
    return %arg0, %c0_i32, %arg1 : i32, i32, i32
  }
  func.func @transform_4(%arg0: i32, %arg1: i32) -> (i32, i32, i32, i32) {
    %c0_i32 = arith.constant 0 : i32
    %c0_i32_0 = arith.constant 0 : i32
    %c0_i32_1 = arith.constant 0 : i32
    return %arg0, %arg1, %c0_i32, %c0_i32_0 : i32, i32, i32, i32
  }
}

module attributes {stable_mosaic.version = 11 : i64} {
  func.func @_proj_kernel(%arg0: i32, %arg1: i32, %arg2: memref<1x16x128xbf16, #tpu.memory_space<vmem>>, %arg3: memref<16x8xf32, #tpu.memory_space<vmem>>, %arg4: memref<2x128xf32, #tpu.memory_space<vmem>>, %arg5: memref<1x16x128xf32, #tpu.memory_space<vmem>>) attributes {dimension_semantics = [#tpu.dimension_semantics<parallel>, #tpu.dimension_semantics<parallel>], iteration_bounds = array<i64: 2, 1>, scalar_prefetch = 0 : i64, scratch_operands = 0 : i64, tpu.core_type = #tpu.core_type<tc>, window_params = [{transform_indices = @transform_0, window_bounds = array<i64: 1, 16, 128>}, {transform_indices = @transform_1, window_bounds = array<i64: 16, 8>}, {pipeline_mode = #tpu.pipeline_mode<synchronous>, transform_indices = @transform_2, window_bounds = array<i64: 2, 128>}, {transform_indices = @transform_3, window_bounds = array<i64: 1, 16, 128>}]} {
    %c0 = arith.constant 0 : index
    %c0_0 = arith.constant 0 : index
    %c0_1 = arith.constant 0 : index
    %0 = vector.load %arg2[%c0, %c0_0, %c0_1] : memref<1x16x128xbf16, #tpu.memory_space<vmem>>, vector<1x16x128xbf16>
    %1 = vector.shape_cast %0 : vector<1x16x128xbf16> to vector<16x128xbf16>
    %2 = arith.extf %1 : vector<16x128xbf16> to vector<16x128xf32>
    %c0_2 = arith.constant 0 : index
    %c0_3 = arith.constant 0 : index
    %3 = vector.load %arg3[%c0_2, %c0_3] : memref<16x8xf32, #tpu.memory_space<vmem>>, vector<16x1xf32>
    %c0_4 = arith.constant 0 : index
    %c1 = arith.constant 1 : index
    %4 = vector.load %arg3[%c0_4, %c1] : memref<16x8xf32, #tpu.memory_space<vmem>>, vector<16x1xf32>
    %c0_5 = arith.constant 0 : index
    %c2 = arith.constant 2 : index
    %5 = vector.load %arg3[%c0_5, %c2] : memref<16x8xf32, #tpu.memory_space<vmem>>, vector<16x1xf32>
    %c0_6 = arith.constant 0 : index
    %c3 = arith.constant 3 : index
    %6 = vector.load %arg3[%c0_6, %c3] : memref<16x8xf32, #tpu.memory_space<vmem>>, vector<16x1xf32>
    %c0_7 = arith.constant 0 : index
    %c4 = arith.constant 4 : index
    %7 = vector.load %arg3[%c0_7, %c4] : memref<16x8xf32, #tpu.memory_space<vmem>>, vector<16x1xf32>
    %8 = vector.broadcast %3 : vector<16x1xf32> to vector<16x128xf32>
    %9 = arith.mulf %8, %2 : vector<16x128xf32>
    %10 = vector.broadcast %4 : vector<16x1xf32> to vector<16x128xf32>
    %11 = arith.addf %9, %10 : vector<16x128xf32>
    %cst = arith.constant 5.000000e-01 : f32
    %12 = vector.broadcast %cst : f32 to vector<16x128xf32>
    %13 = arith.mulf %12, %11 : vector<16x128xf32>
    %cst_8 = arith.constant 4.471500e-02 : f32
    %14 = vector.broadcast %cst_8 : f32 to vector<16x128xf32>
    %15 = arith.mulf %14, %11 : vector<16x128xf32>
    %16 = arith.mulf %15, %11 : vector<16x128xf32>
    %17 = arith.mulf %16, %11 : vector<16x128xf32>
    %18 = arith.addf %11, %17 : vector<16x128xf32>
    %cst_9 = arith.constant 0.797884583 : f32
    %19 = vector.broadcast %cst_9 : f32 to vector<16x128xf32>
    %20 = arith.mulf %19, %18 : vector<16x128xf32>
    %21 = math.tanh %20 : vector<16x128xf32>
    %cst_10 = arith.constant 1.000000e+00 : f32
    %22 = vector.broadcast %cst_10 : f32 to vector<16x128xf32>
    %23 = arith.addf %22, %21 : vector<16x128xf32>
    %24 = arith.mulf %13, %23 : vector<16x128xf32>
    %c1_i32 = arith.constant 1 : i32
    %25 = tpu.dynamic_rotate %24 by %c1_i32 dim 1 : vector<16x128xf32>, i32 -> vector<16x128xf32>
    %c0_11 = arith.constant 0 : index
    %c0_12 = arith.constant 0 : index
    %26 = vector.load %arg4[%c0_11, %c0_12] : memref<2x128xf32, #tpu.memory_space<vmem>>, vector<1x128xf32>
    %27 = vector.broadcast %26 : vector<1x128xf32> to vector<16x128xf32>
    %28 = arith.mulf %25, %27 : vector<16x128xf32>
    %c127_i32 = arith.constant 127 : i32
    %29 = tpu.dynamic_rotate %24 by %c127_i32 dim 1 : vector<16x128xf32>, i32 -> vector<16x128xf32>
    %c1_13 = arith.constant 1 : index
    %c0_14 = arith.constant 0 : index
    %30 = vector.load %arg4[%c1_13, %c0_14] : memref<2x128xf32, #tpu.memory_space<vmem>>, vector<1x128xf32>
    %31 = vector.broadcast %30 : vector<1x128xf32> to vector<16x128xf32>
    %32 = arith.mulf %29, %31 : vector<16x128xf32>
    %33 = vector.broadcast %5 : vector<16x1xf32> to vector<16x128xf32>
    %34 = arith.mulf %33, %28 : vector<16x128xf32>
    %35 = vector.broadcast %6 : vector<16x1xf32> to vector<16x128xf32>
    %36 = arith.mulf %35, %24 : vector<16x128xf32>
    %37 = arith.addf %34, %36 : vector<16x128xf32>
    %38 = vector.broadcast %7 : vector<16x1xf32> to vector<16x128xf32>
    %39 = arith.mulf %38, %32 : vector<16x128xf32>
    %40 = arith.addf %37, %39 : vector<16x128xf32>
    %41 = arith.addf %40, %2 : vector<16x128xf32>
    %c0_15 = arith.constant 0 : index
    %c0_16 = arith.constant 0 : index
    %c0_17 = arith.constant 0 : index
    %42 = vector.load %arg5[%c0_15, %c0_16, %c0_17] : memref<1x16x128xf32, #tpu.memory_space<vmem>>, vector<1x16x128xf32>
    %43 = vector.shape_cast %42 : vector<1x16x128xf32> to vector<16x128xf32>
    %44 = vector.shape_cast %41 : vector<16x128xf32> to vector<1x16x128xf32>
    tpu.vector_store %arg5[%c0_15, %c0_16, %c0_17], %44 {strides = array<i32>} : memref<1x16x128xf32, #tpu.memory_space<vmem>>, vector<1x16x128xf32>,
    return
  }
  func.func @transform_0(%arg0: i32, %arg1: i32) -> (i32, i32, i32) {
    %c0_i32 = arith.constant 0 : i32
    %c0_i32_0 = arith.constant 0 : i32
    return %arg0, %arg1, %c0_i32 : i32, i32, i32
  }
  func.func @transform_1(%arg0: i32, %arg1: i32) -> (i32, i32) {
    %c0_i32 = arith.constant 0 : i32
    %c0_i32_0 = arith.constant 0 : i32
    return %arg1, %c0_i32 : i32, i32
  }
  func.func @transform_2(%arg0: i32, %arg1: i32) -> (i32, i32) {
    %c0_i32 = arith.constant 0 : i32
    %c0_i32_0 = arith.constant 0 : i32
    %c0_i32_1 = arith.constant 0 : i32
    return %c0_i32, %c0_i32_0 : i32, i32
  }
  func.func @transform_3(%arg0: i32, %arg1: i32) -> (i32, i32, i32) {
    %c0_i32 = arith.constant 0 : i32
    %c0_i32_0 = arith.constant 0 : i32
    return %arg0, %arg1, %c0_i32 : i32, i32, i32
  }
}

</mosaic_0001>

<llo_original>
// kernel: mlp_forward.3
$region0: #{mlp_forward.3}
  #allocation0 [shape = 'u32[]', space=smem, size = 0x4, offset = 0x4, fixed_abs, tag = 'smem constant byte address 0x4 - core index']
  #allocation1 [shape = 'u32[144,128]{1,0:T(1,128)}', space=vmem, size = 0x12000, scoped, tag = 'internal scratch']
  %s0 = inlined_call_operand.vmem [shape: bf16[2,16,128], index: 0, kind: input, shape index: {}]
  %s1 = inlined_call_operand.vmem [shape: f32[16,8], index: 1, kind: input, shape index: {}]
  %s2 = inlined_call_operand.vmem [shape: f32[2,128], index: 2, kind: input, shape index: {}]
  %s3 = inlined_call_operand.hbm [shape: f32[2,16,128], index: 3, kind: output, shape index: {}]
  %s4 = sld [smem:[#allocation0]]
  $region45: #{mlp_forward.3} parent=0
    _
  %s6 = ssub.s32 1, %s4
  %s7 = scalar_select 0, %s6, %s4
  $region1: #{mlp_forward.3} parent=0
    #allocation2 [shape = 'u8[16384]{0}', space=vmem, size = 0x4000, scoped, tag = 'output window, operand 0']
    #allocation3 [shape = 's32[2]{0}', space=sflag, size = 0x8, scoped, tag = 'scoped memory for mlp_forward.3']
    %8 = vsyncpa [#allocation3], 0
    %s9 = scalar_lea.sflag [#allocation3], 1
    %10 = vsyncpa %s9, 0
    loop: start=0, step=1, limit=4
    $region2: #{mlp_forward.3} parent=1 // loop_pre_header
      _
    $region3: #{mlp_forward.3} parent=1 // loop_header
      %s12 = sphi 0, %s16
      %p13 = scmp.ge.s32.totalorder %s12, 4
      %s19 = sphi 0, %s31
      %s20 = sphi 0, %s27
      %s21 = sphi 0, %s19
      %s22 = sphi 0, %s20
      %s23 = sphi 0, %s21
      %s24 = sphi 0, %s22
      %s36 = sphi 0, %s38
      %s39 = sphi 0, %s36
      %s40 = sphi 0, %s39
      %s56 = sphi 0, %s40
      %s62 = sphi 0, %s64
      %s65 = sphi 0, %s62
      %s66 = sphi 0, %s65
      %s82 = sphi 0, %s66
      %s86 = sphi 0, %s86
      %s88 = sphi 0, %s86
      %s89 = sphi 0, %s88
      %s103 = sphi 0, %s89
      %s111 = sphi 0, %s113
      %s114 = sphi 0, %s111
      %s115 = sphi 0, %s114
      %s131 = sphi 0, %s115
    $region4: #{mlp_forward.3} parent=1 // loop_header_branch
      %15 = sbr.rel (%p13) target = $region8
    $region5: #{mlp_forward.3} parent=1 // loop_body
      %s17 = ssub.s32 %s12, 1
      %s18 = ssub.s32 %s12, 2
      %s25 = sadd.s32 1, %s20
      %p26 = scmp.ge.s32.totalorder %s25, 1
      %s27 = scalar_select %p26, 0, %s25
      %s28 = sadd.s32 1, %s19
      %s29 = scalar_select %p26, %s28, %s19
      %p30 = scmp.ge.s32.totalorder %s29, 2
      %s31 = scalar_select %p30, 0, %s29
      %s32 = ssub.s32 %s19, %s31
      %s33 = ssub.s32 %s20, %s27
      %s34 = sor.u32 %s32, %s33
      %p35 = scmp.eq.s32.totalorder %s34, 0
      %s37 = sadd.s32 %s36, 1
      %s38 = scalar_select %p35, %s36, %s37
      %p41 = pneg %p35
      %p42 = scmp.eq.s32.totalorder %s12, 1
      %p43 = por %p41, %p42
      %p44 = scmp.ne.s32.totalorder %s36, %s39
      %p45 = scmp.eq.s32.totalorder %s12, 0
      %p46 = por %p44, %p45
      %p47 = scmp.ne.s32.totalorder %s36, %s39
      %p48 = scmp.eq.s32.totalorder %s17, 1
      %p49 = por %p47, %p48
      %p50 = scmp.ne.s32.totalorder %s39, %s40
      %p51 = scmp.eq.s32.totalorder %s17, 0
      %p52 = por %p50, %p51
      %p53 = scmp.ne.s32.totalorder %s39, %s40
      %p54 = scmp.eq.s32.totalorder %s18, 1
      %p55 = por %p53, %p54
      %p57 = scmp.ne.s32.totalorder %s40, %s56
      %p58 = scmp.eq.s32.totalorder %s18, 0
      %p59 = por %p57, %p58
      %s60 = ssub.s32 %s20, %s27
      %p61 = scmp.eq.s32.totalorder %s60, 0
      %s63 = sadd.s32 %s62, 1
      %s64 = scalar_select %p61, %s62, %s63
      %p67 = pneg %p61
      %p68 = scmp.eq.s32.totalorder %s12, 1
      %p69 = por %p67, %p68
      %p70 = scmp.ne.s32.totalorder %s62, %s65
      %p71 = scmp.eq.s32.totalorder %s12, 0
      %p72 = por %p70, %p71
      %p73 = scmp.ne.s32.totalorder %s62, %s65
      %p74 = scmp.eq.s32.totalorder %s17, 1
      %p75 = por %p73, %p74
      %p76 = scmp.ne.s32.totalorder %s65, %s66
      %p77 = scmp.eq.s32.totalorder %s17, 0
      %p78 = por %p76, %p77
      %p79 = scmp.ne.s32.totalorder %s65, %s66
      %p80 = scmp.eq.s32.totalorder %s18, 1
      %p81 = por %p79, %p80
      %p83 = scmp.ne.s32.totalorder %s66, %s82
      %p84 = scmp.eq.s32.totalorder %s18, 0
      %p85 = por %p83, %p84
      %s87 = sadd.s32 %s86, 1
      %p90 = scmp.eq.s32.totalorder %s12, 1
      %p91 = scmp.ne.s32.totalorder %s86, %s88
      %p92 = scmp.eq.s32.totalorder %s12, 0
      %p93 = por %p91, %p92
      %p94 = scmp.ne.s32.totalorder %s86, %s88
      %p95 = scmp.eq.s32.totalorder %s17, 1
      %p96 = por %p94, %p95
      %p97 = scmp.ne.s32.totalorder %s88, %s89
      %p98 = scmp.eq.s32.totalorder %s17, 0
      %p99 = por %p97, %p98
      %p100 = scmp.ne.s32.totalorder %s88, %s89
      %p101 = scmp.eq.s32.totalorder %s18, 1
      %p102 = por %p100, %p101
      %p104 = scmp.ne.s32.totalorder %s89, %s103
      %p105 = scmp.eq.s32.totalorder %s18, 0
      %p106 = por %p104, %p105
      %s107 = ssub.s32 %s19, %s31
      %s108 = ssub.s32 %s20, %s27
      %s109 = sor.u32 %s107, %s108
      %p110 = scmp.eq.s32.totalorder %s109, 0
      %s112 = sadd.s32 %s111, 1
      %s113 = scalar_select %p110, %s111, %s112
      %p116 = pneg %p110
      %p117 = scmp.eq.s32.totalorder %s12, 1
      %p118 = por %p116, %p117
      %p119 = scmp.ne.s32.totalorder %s111, %s114
      %p120 = scmp.eq.s32.totalorder %s12, 0
      %p121 = por %p119, %p120
      %p122 = scmp.ne.s32.totalorder %s111, %s114
      %p123 = scmp.eq.s32.totalorder %s17, 1
      %p124 = por %p122, %p123
      %p125 = scmp.ne.s32.totalorder %s114, %s115
      %p126 = scmp.eq.s32.totalorder %s17, 0
      %p127 = por %p125, %p126
      %p128 = scmp.ne.s32.totalorder %s114, %s115
      %p129 = scmp.eq.s32.totalorder %s18, 1
      %p130 = por %p128, %p129
      %p132 = scmp.ne.s32.totalorder %s115, %s131
      %p133 = scmp.eq.s32.totalorder %s18, 0
      %p134 = por %p132, %p133
      %p135 = scmp.le.s32.totalorder 1, %s12
      %p136 = scmp.lt.s32.totalorder %s12, 3
      %p137 = pnand %p135, %p136
      %p138 = pneg %p137
      // Predicated region
      $region9: #{mlp_forward.3} parent=5 // pred_check
        _
      $region10: #{mlp_forward.3} parent=5 // pred_check_branch
        %140 = sbr.rel (%p137) target = $region12
      $region11: #{mlp_forward.3} parent=5 // pred_region
        %s141 = ssub.s32 %s12, 1
        // Predicated region
        $region13: #{mlp_forward.3} parent=11 // pred_check
          %p142 = pneg %p78
        $region14: #{mlp_forward.3} parent=11 // pred_check_branch
          %144 = sbr.rel (%p142) target = $region16
        $region15: #{mlp_forward.3} parent=11 // pred_region
          %s145 = smul.u32 2, %s22
          %p146 = scmp.lt.s32.totalorder %s145, 1
          %s147 = scalar_select %p146, %s145, 1
          %s148 = smul.addr %s147, 8
          %s149 = scalar_lea.vmem %s1, %s148
          %s150 = smul.u32 2, %s22
        $region16: #{mlp_forward.3} parent=11 // pred_fallthru
          _
        // Predicated region
        $region17: #{mlp_forward.3} parent=11 // pred_check
          %p151 = pneg %p99
        $region18: #{mlp_forward.3} parent=11 // pred_check_branch
          %153 = sbr.rel (%p151) target = $region20
        $region19: #{mlp_forward.3} parent=11 // pred_region
          _
        $region20: #{mlp_forward.3} parent=11 // pred_fallthru
          _
      $region12: #{mlp_forward.3} parent=5 // pred_fallthru
        _
      %p154 = scmp.lt.s32.totalorder %s12, 2
      // Predicated region
      $region21: #{mlp_forward.3} parent=5 // pred_check
        %p155 = pneg %p154
      $region22: #{mlp_forward.3} parent=5 // pred_check_branch
        %157 = sbr.rel (%p155) target = $region24
      $region23: #{mlp_forward.3} parent=5 // pred_region
        // Predicated region
        $region25: #{mlp_forward.3} parent=23 // pred_check
          %p158 = pneg %p46
        $region26: #{mlp_forward.3} parent=23 // pred_check_branch
          %160 = sbr.rel (%p158) target = $region28
        $region27: #{mlp_forward.3} parent=23 // pred_region
          %s161 = smul.u32 2, %s20
          %p162 = scmp.lt.s32.totalorder %s19, 1
          %s163 = scalar_select %p162, %s19, 1
          %p164 = scmp.lt.s32.totalorder %s161, 1
          %s165 = scalar_select %p164, %s161, 1
          %s166 = smul.addr %s163, 2
          %s167 = sadd.s32 %s165, %s166
          %s168 = smul.addr %s167, 4
          %s169 = scalar_lea.vmem %s0, %s168
          %s170 = smul.u32 2, %s20
        $region28: #{mlp_forward.3} parent=23 // pred_fallthru
          _
      $region24: #{mlp_forward.3} parent=5 // pred_fallthru
        _
      %p171 = scmp.le.s32.totalorder 1, %s12
      %p172 = scmp.lt.s32.totalorder %s12, 3
      %p173 = pnand %p171, %p172
      %p174 = pneg %p173
      // Predicated region
      $region29: #{mlp_forward.3} parent=5 // pred_check
        _
      $region30: #{mlp_forward.3} parent=5 // pred_check_branch
        %176 = sbr.rel (%p173) target = $region32
      $region31: #{mlp_forward.3} parent=5 // pred_region
        %s177 = ssub.s32 %s12, 1
        %s178 = smul.u32 2, %s22
        %p179 = scmp.lt.s32.totalorder %s21, 1
        %s180 = scalar_select %p179, %s21, 1
        %p181 = scmp.lt.s32.totalorder %s178, 1
        %s182 = scalar_select %p181, %s178, 1
        %s183 = smul.addr %s180, 2
        %s184 = sadd.s32 %s182, %s183
        %s185 = smul.addr %s184, 4
        %s186 = scalar_lea.vmem %s0, %s185
        %p187 = pneg %p52
        %p188 = pneg %p49
        %s189 = smul.u32 2, %s22
        %p190 = scmp.lt.s32.totalorder %s189, 1
        %s191 = scalar_select %p190, %s189, 1
        %s192 = smul.addr %s191, 8
        %s193 = scalar_lea.vmem %s1, %s192
        %p194 = pneg %p78
        %p195 = pneg %p75
        %p196 = pneg %p99
        %p197 = pneg %p96
        %p198 = pneg %p127
        %p199 = pneg %p124
        %s200 = sand.u32 %s114, 1
        %s201 = scalar_lea.sflag [#allocation3], %s200
        %s202 = sand.u32 %s114, 1
        %s203 = smul.addr %s202, 16
        %s204 = scalar_lea.vmem [#allocation2], %s203
        %s205 = smul.u32 2, %s22
        %p206 = scmp.lt.s32.totalorder %s21, 1
        %s207 = scalar_select %p206, %s21, 1
        %p208 = scmp.lt.s32.totalorder %s205, 1
        %s209 = scalar_select %p208, %s205, 1
        %s210 = smul.addr %s207, 2
        %s211 = sadd.s32 %s209, %s210
        %s212 = smul.addr %s211, 4
        %s213 = scalar_lea.vmem %s0, %s212
        %s214 = smul.u32 2, %s22
        %s215 = smul.u32 2, %s22
        %p216 = scmp.lt.s32.totalorder %s215, 1
        %s217 = scalar_select %p216, %s215, 1
        %s218 = smul.addr %s217, 8
        %s219 = scalar_lea.vmem %s1, %s218
        %s220 = smul.u32 2, %s22
        %s221 = smul.u32 2, %s22
        %v222 = vld [vmem:[%s213] sm:$0xf]
        %v223 = vld [vmem:[%s213 + $0x4] sm:$0xf]
        %v224 = vunpack.c.l.bf16 %v222
        %v225 = vunpack.c.l.bf16 %v223
        %v226 = vld [vmem:[%s219] sm:$0xff]
        %v227 = vld [vmem:[%s219 + $0x8] sm:$0xff]
        %229 = vset.pattern.permute.xlu0 0
        %230 = vperm.xlu0 %229, %v226
        %v231 = vpop.permute.xlu0 %230
        %234 = vset.pattern.permute.xlu0 0
        %235 = vperm.xlu0 %234, %v227
        %v236 = vpop.permute.xlu0 %235
        %v238 = vmul.f32 %v231, %v224
        %v239 = vmul.f32 %v236, %v225
        %240 = vset.pattern.permute.xlu0 1
        %241 = vperm.xlu0 %240, %v226
        %v242 = vpop.permute.xlu0 %241
        %244 = vset.pattern.permute.xlu0 1
        %245 = vperm.xlu0 %244, %v227
        %v246 = vpop.permute.xlu0 %245
        %v248 = vadd.f32 %v238, %v242
        %v249 = vadd.f32 %v239, %v246
        %v250 = vmul.f32 %v248, 0.5
        %v251 = vmul.f32 %v249, 0.5
        %v252 = vmul.f32 %v248, 0.044715
        %v253 = vmul.f32 %v249, 0.044715
        %v254 = vmul.f32 %v252, %v248
        %v255 = vmul.f32 %v253, %v249
        %v256 = vmul.f32 %v254, %v248
        %v257 = vmul.f32 %v255, %v249
        %v258 = vadd.f32 %v248, %v256
        %v259 = vadd.f32 %v249, %v257
        %v260 = vmul.f32 %v258, 0.7978846
        %v261 = vmul.f32 %v259, 0.7978846
        %v262 = vtanh.pop %v260
        %v263 = vtanh.pop %v261
        %v264 = vadd.f32 %v262, 1.0
        %v265 = vadd.f32 %v263, 1.0
        %v266 = vmul.f32 %v250, %v264
        %v267 = vmul.f32 %v251, %v265
        %268 = vrot.lane.b32.xlu0 %v266, 1
        %v269 = vpop.permute.xlu0 %268
        %270 = vrot.lane.b32.xlu0 %v267, 1
        %v271 = vpop.permute.xlu0 %270
        %v272 = vld [vmem:[%s2] sm:$0x1]
        %v273 = vlaneseq
        %v274 = vshrl.u32 %v273, 7
        %v275 = vsub.s32 0, %v274
        %v276 = vrot.slane %v272, %v275
        %v277 = vmul.f32 %v269, %v276
        %v278 = vmul.f32 %v271, %v276
        %279 = vrot.lane.b32.xlu0 %v266, 127
        %v280 = vpop.permute.xlu0 %279
        %281 = vrot.lane.b32.xlu0 %v267, 127
        %v282 = vpop.permute.xlu0 %281
        %v283 = vld [vmem:[%s2 + $0x1] sm:$0x1]
        %v284 = vlaneseq
        %v285 = vshrl.u32 %v284, 7
        %v286 = vsub.s32 0, %v285
        %v287 = vrot.slane %v283, %v286
        %v288 = vmul.f32 %v280, %v287
        %v289 = vmul.f32 %v282, %v287
        %290 = vset.pattern.permute.xlu0 2
        %291 = vperm.xlu0 %290, %v226
        %v292 = vpop.permute.xlu0 %291
        %294 = vset.pattern.permute.xlu0 2
        %295 = vperm.xlu0 %294, %v227
        %v296 = vpop.permute.xlu0 %295
        %v298 = vmul.f32 %v292, %v277
        %v299 = vmul.f32 %v296, %v278
        %300 = vset.pattern.permute.xlu0 3
        %301 = vperm.xlu0 %300, %v226
        %v302 = vpop.permute.xlu0 %301
        %304 = vset.pattern.permute.xlu0 3
        %305 = vperm.xlu0 %304, %v227
        %v306 = vpop.permute.xlu0 %305
        %v308 = vmul.f32 %v302, %v266
        %v309 = vmul.f32 %v306, %v267
        %v310 = vadd.f32 %v298, %v308
        %v311 = vadd.f32 %v299, %v309
        %312 = vset.pattern.permute.xlu0 4
        %313 = vperm.xlu0 %312, %v226
        %v314 = vpop.permute.xlu0 %313
        %316 = vset.pattern.permute.xlu0 4
        %317 = vperm.xlu0 %316, %v227
        %v318 = vpop.permute.xlu0 %317
        %v320 = vmul.f32 %v314, %v288
        %v321 = vmul.f32 %v318, %v289
        %v322 = vadd.f32 %v310, %v320
        %v323 = vadd.f32 %v311, %v321
        %v324 = vadd.f32 %v322, %v224
        %v325 = vadd.f32 %v323, %v225
        %326 = vst [vmem:[%s204] sm:$0xff] %v324
        %327 = vst [vmem:[%s204 + $0x8] sm:$0xff] %v325
        %s328 = sand.u32 %s114, 1
        %s329 = scalar_lea.sflag [#allocation3], %s328
        %s330 = sand.u32 %s114, 1
        %s331 = smul.addr %s330, 16
        %s332 = scalar_lea.vmem [#allocation2], %s331
        // Predicated region
        $region33: #{mlp_forward.3} parent=31 // pred_check
          %p333 = pneg %p124
        $region34: #{mlp_forward.3} parent=31 // pred_check_branch
          %335 = sbr.rel (%p333) target = $region36
        $region35: #{mlp_forward.3} parent=31 // pred_region
          %s336 = smul.u32 2, %s22
          %s338 = ssub.s32 256, 256
          %339 = vsyncadd %s329, %s338
          %s340 = smul.addr %s21, 2
          %s341 = sadd.s32 %s336, %s340
          %s342 = smul.addr %s341, 128
          %s343 = scalar_lea.hbm %s3, %s342
          %s344 = sshll.u32 %s332, 4
          %s345 = int_to_ptr.vmem [resolvable:$true] %s344
          %350 = dma.vmem_to_hbm [thread:$0]  %s345, 256, %s343, %s329, 128, 128, 8
        $region36: #{mlp_forward.3} parent=31 // pred_fallthru
          _
      $region32: #{mlp_forward.3} parent=5 // pred_fallthru
        _
      %p351 = scmp.le.s32.totalorder 2, %s12
      // Predicated region
      $region37: #{mlp_forward.3} parent=5 // pred_check
        %p352 = pneg %p351
      $region38: #{mlp_forward.3} parent=5 // pred_check_branch
        %354 = sbr.rel (%p352) target = $region40
      $region39: #{mlp_forward.3} parent=5 // pred_region
        %s355 = ssub.s32 %s12, 2
        // Predicated region
        $region41: #{mlp_forward.3} parent=39 // pred_check
          %p356 = pneg %p130
        $region42: #{mlp_forward.3} parent=39 // pred_check_branch
          %358 = sbr.rel (%p356) target = $region44
        $region43: #{mlp_forward.3} parent=39 // pred_region
          %s359 = sand.u32 %s115, 1
          %s360 = scalar_lea.sflag [#allocation3], %s359
          %s361 = sand.u32 %s115, 1
          %s362 = smul.addr %s361, 16
          %s363 = scalar_lea.vmem [#allocation2], %s362
          %364 = dma.done %s360, 256
        $region44: #{mlp_forward.3} parent=39 // pred_fallthru
          _
      $region40: #{mlp_forward.3} parent=5 // pred_fallthru
        _
    $region6: #{mlp_forward.3} parent=1 // loop_footer
      %s16 = sadd.s32 1, %s12
    $region7: #{mlp_forward.3} parent=1 // loop_footer_branch
      %11 = sbr.rel target = $region3
    $region8: #{mlp_forward.3} parent=1 // loop_exit
      _
    %365 = vsyncpa [#allocation3], 1
    %s366 = scalar_lea.sflag [#allocation3], 1
    %367 = vsyncpa %s366, 1

// kernel: mlp_forward.2
$region0: #{mlp_forward.2}
  #allocation0 [shape = 'u32[]', space=smem, size = 0x4, offset = 0x4, fixed_abs, tag = 'smem constant byte address 0x4 - core index']
  #allocation1 [shape = 'u32[144,128]{1,0:T(1,128)}', space=vmem, size = 0x12000, scoped, tag = 'internal scratch']
  %s0 = inlined_call_operand.vmem [shape: f32[2,16,128], index: 0, kind: input, shape index: {}]
  %s1 = inlined_call_operand.vmem [shape: f32[16,2], index: 1, kind: input, shape index: {}]
  %s2 = inlined_call_operand.vmem [shape: bf16[16,16], index: 2, kind: input, shape index: {}]
  %s3 = inlined_call_operand.vmem [shape: bf16[2,16,128], index: 3, kind: output, shape index: {0}]
  %s4 = inlined_call_operand.vmem [shape: f32[2,1,16,2], index: 4, kind: output, shape index: {1}]
  %5 = xla_tuple %s3, %s4
  %s6 = sld [smem:[#allocation0]]
  $region53: #{mlp_forward.2} parent=0
    _
  %s8 = ssub.s32 1, %s6
  %s9 = scalar_select 0, %s8, %s6
  loop: start=0, step=1, limit=4
  $region2: #{mlp_forward.2} parent=0 // loop_pre_header
    _
  $region3: #{mlp_forward.2} parent=0 // loop_header
    %s11 = sphi 0, %s15
    %p12 = scmp.ge.s32.totalorder %s11, 4
    %s18 = sphi 0, %s30
    %s19 = sphi 0, %s26
    %s20 = sphi 0, %s18
    %s21 = sphi 0, %s19
    %s22 = sphi 0, %s20
    %s23 = sphi 0, %s21
    %s35 = sphi 0, %s37
    %s38 = sphi 0, %s35
    %s39 = sphi 0, %s38
    %s55 = sphi 0, %s39
    %s59 = sphi 0, %s59
    %s61 = sphi 0, %s59
    %s62 = sphi 0, %s61
    %s76 = sphi 0, %s62
    %s80 = sphi 0, %s80
    %s82 = sphi 0, %s80
    %s83 = sphi 0, %s82
    %s97 = sphi 0, %s83
    %s105 = sphi 0, %s107
    %s108 = sphi 0, %s105
    %s109 = sphi 0, %s108
    %s125 = sphi 0, %s109
    %s133 = sphi 0, %s135
    %s136 = sphi 0, %s133
    %s137 = sphi 0, %s136
    %s153 = sphi 0, %s137
  $region4: #{mlp_forward.2} parent=0 // loop_header_branch
    %14 = sbr.rel (%p12) target = $region8
  $region5: #{mlp_forward.2} parent=0 // loop_body
    %s16 = ssub.s32 %s11, 1
    %s17 = ssub.s32 %s11, 2
    %s24 = sadd.s32 1, %s19
    %p25 = scmp.ge.s32.totalorder %s24, 1
    %s26 = scalar_select %p25, 0, %s24
    %s27 = sadd.s32 1, %s18
    %s28 = scalar_select %p25, %s27, %s18
    %p29 = scmp.ge.s32.totalorder %s28, 2
    %s30 = scalar_select %p29, 0, %s28
    %s31 = ssub.s32 %s18, %s30
    %s32 = ssub.s32 %s19, %s26
    %s33 = sor.u32 %s31, %s32
    %p34 = scmp.eq.s32.totalorder %s33, 0
    %s36 = sadd.s32 %s35, 1
    %s37 = scalar_select %p34, %s35, %s36
    %p40 = pneg %p34
    %p41 = scmp.eq.s32.totalorder %s11, 1
    %p42 = por %p40, %p41
    %p43 = scmp.ne.s32.totalorder %s35, %s38
    %p44 = scmp.eq.s32.totalorder %s11, 0
    %p45 = por %p43, %p44
    %p46 = scmp.ne.s32.totalorder %s35, %s38
    %p47 = scmp.eq.s32.totalorder %s16, 1
    %p48 = por %p46, %p47
    %p49 = scmp.ne.s32.totalorder %s38, %s39
    %p50 = scmp.eq.s32.totalorder %s16, 0
    %p51 = por %p49, %p50
    %p52 = scmp.ne.s32.totalorder %s38, %s39
    %p53 = scmp.eq.s32.totalorder %s17, 1
    %p54 = por %p52, %p53
    %p56 = scmp.ne.s32.totalorder %s39, %s55
    %p57 = scmp.eq.s32.totalorder %s17, 0
    %p58 = por %p56, %p57
    %s60 = sadd.s32 %s59, 1
    %p63 = scmp.eq.s32.totalorder %s11, 1
    %p64 = scmp.ne.s32.totalorder %s59, %s61
    %p65 = scmp.eq.s32.totalorder %s11, 0
    %p66 = por %p64, %p65
    %p67 = scmp.ne.s32.totalorder %s59, %s61
    %p68 = scmp.eq.s32.totalorder %s16, 1
    %p69 = por %p67, %p68
    %p70 = scmp.ne.s32.totalorder %s61, %s62
    %p71 = scmp.eq.s32.totalorder %s16, 0
    %p72 = por %p70, %p71
    %p73 = scmp.ne.s32.totalorder %s61, %s62
    %p74 = scmp.eq.s32.totalorder %s17, 1
    %p75 = por %p73, %p74
    %p77 = scmp.ne.s32.totalorder %s62, %s76
    %p78 = scmp.eq.s32.totalorder %s17, 0
    %p79 = por %p77, %p78
    %s81 = sadd.s32 %s80, 1
    %p84 = scmp.eq.s32.totalorder %s11, 1
    %p85 = scmp.ne.s32.totalorder %s80, %s82
    %p86 = scmp.eq.s32.totalorder %s11, 0
    %p87 = por %p85, %p86
    %p88 = scmp.ne.s32.totalorder %s80, %s82
    %p89 = scmp.eq.s32.totalorder %s16, 1
    %p90 = por %p88, %p89
    %p91 = scmp.ne.s32.totalorder %s82, %s83
    %p92 = scmp.eq.s32.totalorder %s16, 0
    %p93 = por %p91, %p92
    %p94 = scmp.ne.s32.totalorder %s82, %s83
    %p95 = scmp.eq.s32.totalorder %s17, 1
    %p96 = por %p94, %p95
    %p98 = scmp.ne.s32.totalorder %s83, %s97
    %p99 = scmp.eq.s32.totalorder %s17, 0
    %p100 = por %p98, %p99
    %s101 = ssub.s32 %s18, %s30
    %s102 = ssub.s32 %s19, %s26
    %s103 = sor.u32 %s101, %s102
    %p104 = scmp.eq.s32.totalorder %s103, 0
    %s106 = sadd.s32 %s105, 1
    %s107 = scalar_select %p104, %s105, %s106
    %p110 = pneg %p104
    %p111 = scmp.eq.s32.totalorder %s11, 1
    %p112 = por %p110, %p111
    %p113 = scmp.ne.s32.totalorder %s105, %s108
    %p114 = scmp.eq.s32.totalorder %s11, 0
    %p115 = por %p113, %p114
    %p116 = scmp.ne.s32.totalorder %s105, %s108
    %p117 = scmp.eq.s32.totalorder %s16, 1
    %p118 = por %p116, %p117
    %p119 = scmp.ne.s32.totalorder %s108, %s109
    %p120 = scmp.eq.s32.totalorder %s16, 0
    %p121 = por %p119, %p120
    %p122 = scmp.ne.s32.totalorder %s108, %s109
    %p123 = scmp.eq.s32.totalorder %s17, 1
    %p124 = por %p122, %p123
    %p126 = scmp.ne.s32.totalorder %s109, %s125
    %p127 = scmp.eq.s32.totalorder %s17, 0
    %p128 = por %p126, %p127
    %s129 = ssub.s32 %s18, %s30
    %s130 = ssub.s32 %s19, %s26
    %s131 = sor.u32 %s129, %s130
    %p132 = scmp.eq.s32.totalorder %s131, 0
    %s134 = sadd.s32 %s133, 1
    %s135 = scalar_select %p132, %s133, %s134
    %p138 = pneg %p132
    %p139 = scmp.eq.s32.totalorder %s11, 1
    %p140 = por %p138, %p139
    %p141 = scmp.ne.s32.totalorder %s133, %s136
    %p142 = scmp.eq.s32.totalorder %s11, 0
    %p143 = por %p141, %p142
    %p144 = scmp.ne.s32.totalorder %s133, %s136
    %p145 = scmp.eq.s32.totalorder %s16, 1
    %p146 = por %p144, %p145
    %p147 = scmp.ne.s32.totalorder %s136, %s137
    %p148 = scmp.eq.s32.totalorder %s16, 0
    %p149 = por %p147, %p148
    %p150 = scmp.ne.s32.totalorder %s136, %s137
    %p151 = scmp.eq.s32.totalorder %s17, 1
    %p152 = por %p150, %p151
    %p154 = scmp.ne.s32.totalorder %s137, %s153
    %p155 = scmp.eq.s32.totalorder %s17, 0
    %p156 = por %p154, %p155
    %p157 = scmp.le.s32.totalorder 1, %s11
    %p158 = scmp.lt.s32.totalorder %s11, 3
    %p159 = pnand %p157, %p158
    %p160 = pneg %p159
    // Predicated region
    $region9: #{mlp_forward.2} parent=5 // pred_check
      _
    $region10: #{mlp_forward.2} parent=5 // pred_check_branch
      %162 = sbr.rel (%p159) target = $region12
    $region11: #{mlp_forward.2} parent=5 // pred_region
      %s163 = ssub.s32 %s11, 1
      // Predicated region
      $region13: #{mlp_forward.2} parent=11 // pred_check
        %p164 = pneg %p72
      $region14: #{mlp_forward.2} parent=11 // pred_check_branch
        %166 = sbr.rel (%p164) target = $region16
      $region15: #{mlp_forward.2} parent=11 // pred_region
        _
      $region16: #{mlp_forward.2} parent=11 // pred_fallthru
        _
      // Predicated region
      $region17: #{mlp_forward.2} parent=11 // pred_check
        %p167 = pneg %p93
      $region18: #{mlp_forward.2} parent=11 // pred_check_branch
        %169 = sbr.rel (%p167) target = $region20
      $region19: #{mlp_forward.2} parent=11 // pred_region
        _
      $region20: #{mlp_forward.2} parent=11 // pred_fallthru
        _
    $region12: #{mlp_forward.2} parent=5 // pred_fallthru
      _
    %p170 = scmp.lt.s32.totalorder %s11, 2
    // Predicated region
    $region21: #{mlp_forward.2} parent=5 // pred_check
      %p171 = pneg %p170
    $region22: #{mlp_forward.2} parent=5 // pred_check_branch
      %173 = sbr.rel (%p171) target = $region24
    $region23: #{mlp_forward.2} parent=5 // pred_region
      // Predicated region
      $region25: #{mlp_forward.2} parent=23 // pred_check
        %p174 = pneg %p45
      $region26: #{mlp_forward.2} parent=23 // pred_check_branch
        %176 = sbr.rel (%p174) target = $region28
      $region27: #{mlp_forward.2} parent=23 // pred_region
        %p177 = scmp.lt.s32.totalorder %s18, 1
        %s178 = scalar_select %p177, %s18, 1
        %p179 = scmp.lt.s32.totalorder %s19, 0
        %s180 = scalar_select %p179, %s19, 0
        %s181 = smul.addr %s178, 2
        %s182 = sadd.s32 %s180, %s181
        %s183 = smul.addr %s182, 8
        %s184 = scalar_lea.vmem %s0, %s183
      $region28: #{mlp_forward.2} parent=23 // pred_fallthru
        _
    $region24: #{mlp_forward.2} parent=5 // pred_fallthru
      _
    %p185 = scmp.le.s32.totalorder 1, %s11
    %p186 = scmp.lt.s32.totalorder %s11, 3
    %p187 = pnand %p185, %p186
    %p188 = pneg %p187
    // Predicated region
    $region29: #{mlp_forward.2} parent=5 // pred_check
      _
    $region30: #{mlp_forward.2} parent=5 // pred_check_branch
      %190 = sbr.rel (%p187) target = $region32
    $region31: #{mlp_forward.2} parent=5 // pred_region
      %s191 = ssub.s32 %s11, 1
      %p192 = scmp.lt.s32.totalorder %s20, 1
      %s193 = scalar_select %p192, %s20, 1
      %p194 = scmp.lt.s32.totalorder %s21, 0
      %s195 = scalar_select %p194, %s21, 0
      %s196 = smul.addr %s193, 2
      %s197 = sadd.s32 %s195, %s196
      %s198 = smul.addr %s197, 8
      %s199 = scalar_lea.vmem %s0, %s198
      %p200 = pneg %p51
      %p201 = pneg %p48
      %p202 = pneg %p72
      %p203 = pneg %p69
      %p204 = pneg %p93
      %p205 = pneg %p90
      %p206 = pneg %p121
      %p207 = pneg %p118
      %p208 = scmp.lt.s32.totalorder %s20, 1
      %s209 = scalar_select %p208, %s20, 1
      %p210 = scmp.lt.s32.totalorder %s21, 0
      %s211 = scalar_select %p210, %s21, 0
      %s212 = smul.addr %s209, 2
      %s213 = sadd.s32 %s211, %s212
      %s214 = smul.addr %s213, 4
      %s215 = scalar_lea.vmem %s3, %s214
      %p216 = pneg %p149
      %p217 = pneg %p146
      %p218 = scmp.lt.s32.totalorder %s20, 1
      %s219 = scalar_select %p218, %s20, 1
      %p220 = scmp.lt.s32.totalorder %s21, 0
      %s221 = scalar_select %p220, %s21, 0
      %s222 = smul.addr %s221, 2
      %s223 = smul.addr %s219, 2
      %s224 = sadd.s32 %s222, %s223
      %s225 = smul.addr %s224, 8
      %s226 = scalar_lea.vmem %s4, %s225
      %p227 = scmp.lt.s32.totalorder %s20, 1
      %s228 = scalar_select %p227, %s20, 1
      %p229 = scmp.lt.s32.totalorder %s21, 0
      %s230 = scalar_select %p229, %s21, 0
      %s231 = smul.addr %s228, 2
      %s232 = sadd.s32 %s230, %s231
      %s233 = smul.addr %s232, 8
      %s234 = scalar_lea.vmem %s0, %s233
      %p235 = scmp.lt.s32.totalorder %s20, 1
      %s236 = scalar_select %p235, %s20, 1
      %p237 = scmp.lt.s32.totalorder %s21, 0
      %s238 = scalar_select %p237, %s21, 0
      %s239 = smul.addr %s236, 2
      %s240 = sadd.s32 %s238, %s239
      %s241 = smul.addr %s240, 4
      %s242 = scalar_lea.vmem %s3, %s241
      %p243 = scmp.lt.s32.totalorder %s20, 1
      %s244 = scalar_select %p243, %s20, 1
      %p245 = scmp.lt.s32.totalorder %s21, 0
      %s246 = scalar_select %p245, %s21, 0
      %s247 = smul.addr %s246, 2
      %s248 = smul.addr %s244, 2
      %s249 = sadd.s32 %s247, %s248
      %s250 = smul.addr %s249, 8
      %s251 = scalar_lea.vmem %s4, %s250
      %v253 = vld [vmem:[%s234] sm:$0xff]
      %v254 = vld [vmem:[%s234 + $0x8] sm:$0xff]
      %v255 = vld [vmem:[%s1] sm:$0xff]
      %v256 = vld [vmem:[%s1 + $0x8] sm:$0xff]
      %258 = vset.pattern.permute.xlu0 0
      %259 = vperm.xlu0 %258, %v255
      %v260 = vpop.permute.xlu0 %259
      %263 = vset.pattern.permute.xlu0 0
      %264 = vperm.xlu0 %263, %v256
      %v265 = vpop.permute.xlu0 %264
      %v267 = vmul.f32 %v260, %v253
      %v268 = vmul.f32 %v265, %v254
      %269 = vset.pattern.permute.xlu0 1
      %270 = vperm.xlu0 %269, %v255
      %v271 = vpop.permute.xlu0 %270
      %273 = vset.pattern.permute.xlu0 1
      %274 = vperm.xlu0 %273, %v256
      %v275 = vpop.permute.xlu0 %274
      %v277 = vadd.f32 %v267, %v271
      %v278 = vadd.f32 %v268, %v275
      %v279 = vmul.f32 %v277, 0.5
      %v280 = vmul.f32 %v278, 0.5
      %v281 = vmul.f32 %v277, 0.044715
      %v282 = vmul.f32 %v278, 0.044715
      %v283 = vmul.f32 %v281, %v277
      %v284 = vmul.f32 %v282, %v278
      %v285 = vmul.f32 %v283, %v277
      %v286 = vmul.f32 %v284, %v278
      %v287 = vadd.f32 %v277, %v285
      %v288 = vadd.f32 %v278, %v286
      %v289 = vmul.f32 %v287, 0.7978846
      %v290 = vmul.f32 %v288, 0.7978846
      %v291 = vtanh.pop %v289
      %v292 = vtanh.pop %v290
      %v293 = vadd.f32 %v291, 1.0
      %v294 = vadd.f32 %v292, 1.0
      %v295 = vmul.f32 %v279, %v293
      %v296 = vmul.f32 %v280, %v294
      %v297 = vpack.c.bf16 %v296, %v295
      %v298 = vld [vmem:[%s2] sm:$0xf]
      %v299 = vld [vmem:[%s2 + $0x4] sm:$0xf]
      %v302 = vunpack.c.l.b16 %v298
      %v303 = vunpack.c.l.b16 %v299
      %v304 = vpack.c.b16 %v303, %v302
      %vm305 = vcmask 130048
      %v307 = vsel %vm305, %v304, 0
      %309 = vmatprep.subr.bf16.mxu0 0
      %310 = vmatpush1.bf16.msra.mxu0 %v297
      %311 = vmatprep.subr.bf16.mxu0 0
      %312 = vmatpush1.bf16.msra.mxu0 0
      %313 = vmatprep.subr.bf16.mxu0 0
      %314 = vmatpush1.bf16.msra.mxu0 0
      %315 = vmatprep.subr.bf16.mxu0 0
      %316 = vmatpush1.bf16.msra.mxu0 0
      %317 = vmatprep.subr.bf16.mxu0 0
      %318 = vmatpush1.bf16.msra.mxu0 0
      %319 = vmatprep.subr.bf16.mxu0 0
      %320 = vmatpush1.bf16.msra.mxu0 0
      %321 = vmatprep.subr.bf16.mxu0 0
      %322 = vmatpush1.bf16.msra.mxu0 0
      %323 = vmatprep.subr.bf16.mxu0 0
      %324 = vmatpush1.bf16.msra.mxu0 0
      %325 = vmatprep.subr.bf16.mxu0 0
      %326 = vmatpush1.bf16.msra.mxu0 0
      %327 = vmatprep.subr.bf16.mxu0 0
      %328 = vmatpush1.bf16.msra.mxu0 0
      %329 = vmatprep.subr.bf16.mxu0 0
      %330 = vmatpush1.bf16.msra.mxu0 0
      %331 = vmatprep.subr.bf16.mxu0 0
      %332 = vmatpush1.bf16.msra.mxu0 0
      %333 = vmatprep.subr.bf16.mxu0 0
      %334 = vmatpush1.bf16.msra.mxu0 0
      %335 = vmatprep.subr.bf16.mxu0 0
      %336 = vmatpush1.bf16.msra.mxu0 0
      %337 = vmatprep.subr.bf16.mxu0 0
      %338 = vmatpush1.bf16.msra.mxu0 0
      %339 = vmatprep.subr.bf16.mxu0 0
      %340 = vmatpush1.bf16.msra.mxu0 0
      %341 = vmatprep.mubr.bf16.mxu0 0
      %342 = vmatmul.mubr.bf16.gmra.mrb[0].mxu0 %v307
      %v343 = vpop.f32.mrb[0].mxu0
      %v344 = vadd.f32 0.0, %v343
      %v345 = vpop.f32.mrb[0].mxu0
      %v346 = vpop.f32.mrb[0].mxu0
      %v347 = vadd.f32 0.0, %v346
      %v348 = vpop.f32.mrb[0].mxu0
      %349 = vdwg.mxu0
      %v350 = vpack.c.bf16 %v347, %v344
      %v352 = vunpack.c.l.b16 %v350
      %v353 = vunpack.c.h.b16 %v350
      %v354 = vpack.c.b16 %v352, %v352
      %v355 = vpack.c.b16 %v353, %v353
      %358 = vst [vmem:[%s242] sm:$0xf] %v354
      %359 = vst [vmem:[%s242 + $0x4] sm:$0xf] %v355
      %360 = vadd.xlane.f32.xlu0 %v344
      %v361 = vpop.xlane.xlu0 %360
      %362 = vadd.xlane.f32.xlu0 %v347
      %v363 = vpop.xlane.xlu0 %362
      %vm364 = vcmask 7168
      %365 = vst.msk [vmem:[%s251] sm:$0xff] %vm364, %v361
      %366 = vst.msk [vmem:[%s251 + $0x8] sm:$0xff] %vm364, %v363
      %v367 = vmul.f32 %v344, %v344
      %v368 = vmul.f32 %v347, %v347
      %369 = vadd.xlane.f32.xlu0 %v367
      %v370 = vpop.xlane.xlu0 %369
      %371 = vadd.xlane.f32.xlu0 %v368
      %v372 = vpop.xlane.xlu0 %371
      %vm373 = vcmask 15368
      %374 = vst.msk [vmem:[%s251] sm:$0xff] %vm373, %v370
      %375 = vst.msk [vmem:[%s251 + $0x8] sm:$0xff] %vm373, %v372
      %p376 = scmp.lt.s32.totalorder %s20, 1
      %s377 = scalar_select %p376, %s20, 1
      %p378 = scmp.lt.s32.totalorder %s21, 0
      %s379 = scalar_select %p378, %s21, 0
      %s380 = smul.addr %s377, 2
      %s381 = sadd.s32 %s379, %s380
      %s382 = smul.addr %s381, 4
      %s383 = scalar_lea.vmem %s3, %s382
      %p384 = scmp.lt.s32.totalorder %s20, 1
      %s385 = scalar_select %p384, %s20, 1
      %p386 = scmp.lt.s32.totalorder %s21, 0
      %s387 = scalar_select %p386, %s21, 0
      %s388 = smul.addr %s387, 2
      %s389 = smul.addr %s385, 2
      %s390 = sadd.s32 %s388, %s389
      %s391 = smul.addr %s390, 8
      %s392 = scalar_lea.vmem %s4, %s391
      // Predicated region
      $region33: #{mlp_forward.2} parent=31 // pred_check
        %p393 = pneg %p118
      $region34: #{mlp_forward.2} parent=31 // pred_check_branch
        %395 = sbr.rel (%p393) target = $region36
      $region35: #{mlp_forward.2} parent=31 // pred_region
        _
      $region36: #{mlp_forward.2} parent=31 // pred_fallthru
        _
      // Predicated region
      $region37: #{mlp_forward.2} parent=31 // pred_check
        %p396 = pneg %p146
      $region38: #{mlp_forward.2} parent=31 // pred_check_branch
        %398 = sbr.rel (%p396) target = $region40
      $region39: #{mlp_forward.2} parent=31 // pred_region
        _
      $region40: #{mlp_forward.2} parent=31 // pred_fallthru
        _
    $region32: #{mlp_forward.2} parent=5 // pred_fallthru
      _
    %p399 = scmp.le.s32.totalorder 2, %s11
    // Predicated region
    $region41: #{mlp_forward.2} parent=5 // pred_check
      %p400 = pneg %p399
    $region42: #{mlp_forward.2} parent=5 // pred_check_branch
      %402 = sbr.rel (%p400) target = $region44
    $region43: #{mlp_forward.2} parent=5 // pred_region
      %s403 = ssub.s32 %s11, 2
      // Predicated region
      $region45: #{mlp_forward.2} parent=43 // pred_check
        %p404 = pneg %p124
      $region46: #{mlp_forward.2} parent=43 // pred_check_branch
        %406 = sbr.rel (%p404) target = $region48
      $region47: #{mlp_forward.2} parent=43 // pred_region
        %p407 = scmp.lt.s32.totalorder %s22, 1
        %s408 = scalar_select %p407, %s22, 1
        %p409 = scmp.lt.s32.totalorder %s23, 0
        %s410 = scalar_select %p409, %s23, 0
        %s411 = smul.addr %s408, 2
        %s412 = sadd.s32 %s410, %s411
        %s413 = smul.addr %s412, 4
        %s414 = scalar_lea.vmem %s3, %s413
      $region48: #{mlp_forward.2} parent=43 // pred_fallthru
        _
      // Predicated region
      $region49: #{mlp_forward.2} parent=43 // pred_check
        %p415 = pneg %p152
      $region50: #{mlp_forward.2} parent=43 // pred_check_branch
        %417 = sbr.rel (%p415) target = $region52
      $region51: #{mlp_forward.2} parent=43 // pred_region
        %p418 = scmp.lt.s32.totalorder %s22, 1
        %s419 = scalar_select %p418, %s22, 1
        %p420 = scmp.lt.s32.totalorder %s23, 0
        %s421 = scalar_select %p420, %s23, 0
        %s422 = smul.addr %s421, 2
        %s423 = smul.addr %s419, 2
        %s424 = sadd.s32 %s422, %s423
        %s425 = smul.addr %s424, 8
        %s426 = scalar_lea.vmem %s4, %s425
      $region52: #{mlp_forward.2} parent=43 // pred_fallthru
        _
    $region44: #{mlp_forward.2} parent=5 // pred_fallthru
      _
  $region6: #{mlp_forward.2} parent=0 // loop_footer
    %s15 = sadd.s32 1, %s11
  $region7: #{mlp_forward.2} parent=0 // loop_footer_branch
    %10 = sbr.rel target = $region3
  $region8: #{mlp_forward.2} parent=0 // loop_exit
    _

</llo_original>
